<compile_context>
chip_gen: v5e
topology: v5e:2x2
jax: 0.10.0
libtpu: 0.0.40
codegen_flags: <defaults>
</compile_context>

<pallas_src>
import functools

import jax
import jax.numpy as jnp
from jax.experimental import pallas as pl
from jax.experimental.pallas import tpu as pltpu


H1_LOGICAL, H2_LOGICAL = 500, 300          # nn.Linear sizes from the module
H1_PAD, H2_PAD = 512, 384                  # lane-aligned (multiples of 128)


def _round_up(x, m):
    return ((x + m - 1) // m) * m


def _critic_kernel(sa_ref, w1_ref, b1_ref, w2_ref, b2_ref, w3_ref, b3_ref,
                   q_ref):
    # Layer 1 -- single fused matmul over the concatenated [state, action]
    # input (bf16 operands, f32 accumulation on the MXU).
    h1 = jnp.dot(sa_ref[...], w1_ref[...], preferred_element_type=jnp.float32)
    h1 = jnp.maximum(h1 + b1_ref[...], 0.0)            # f32 bias + ReLU (VPU)

    # Layer 2
    h2 = jnp.dot(h1.astype(w2_ref.dtype), w2_ref[...],
                 preferred_element_type=jnp.float32)
    h2 = jnp.maximum(h2 + b2_ref[...], 0.0)

    # Layer 3 (out_features == 1): elementwise multiply + lane reduction on the
    # VPU/XLU instead of an N=1 MXU matmul.  w3 is a [1, H2_PAD] row.
    w3 = w3_ref[...].astype(jnp.float32)
    q = jnp.sum(h2 * w3, axis=-1, keepdims=True)
    q_ref[...] = (q + b3_ref[0]).astype(q_ref.dtype)    # b3 scalar from SMEM


@functools.partial(jax.jit, static_argnames=("tile_b",))
def critic_forward(state, action, params, *, tile_b=1024):
    """Pallas forward pass of the Critic.

    state:  [B, state_dim]  float32
    action: [B, action_dim] float32
    params: see init_critic_params (combined/padded bf16 weights, f32 biases).
    Returns q: [B, 1] float32.
    """
    b, state_dim = state.shape
    action_dim = action.shape[1]
    k_in = state_dim + action_dim

    # Fused "concat" done once in the wrapper; cast to the weight dtype here so
    # the per-step input DMA is half-width and no per-tile VPU casts are needed.
    sa = jnp.concatenate([state.astype(jnp.float32),
                          action.astype(jnp.float32)], axis=1)
    sa = sa.astype(params["w1"].dtype)

    # Round batch up to a sublane multiple so block shapes are legal.
    b_pad = _round_up(b, 8)
    if b_pad != b:
        sa = jnp.pad(sa, ((0, b_pad - b), (0, 0)))

    # Pick the batch tile: as large as requested, but always >= 2 grid steps
    # when the batch allows so input/output DMAs pipeline against compute and
    # the "parallel" axis can shard across TensorCores (megacore / v7x 2-TC).
    tile_b = _round_up(max(int(tile_b), 8), 8)
    if b_pad >= 16:
        tb = min(tile_b, _round_up(pl.cdiv(b_pad, 2), 8))
    else:
        tb = b_pad
    grid = (pl.cdiv(b_pad, tb),)

    batch_blk = lambda i: (i, 0)       # activations/output follow the batch tile
    resident = lambda i: (0, 0)        # weights/biases stay resident across grid

    itemsize = lambda a: jnp.dtype(a.dtype).itemsize
    weight_bytes = sum(p.size * itemsize(p)
                       for p in (params["w1"], params["b1"], params["w2"],
                                 params["b2"], params["w3"], params["b3"]))
    cost = pl.CostEstimate(
        flops=int(2 * b_pad * (k_in * H1_PAD + H1_PAD * H2_PAD + H2_PAD)),
        transcendentals=0,
        bytes_accessed=int(b_pad * k_in * itemsize(sa) + weight_bytes
                           + b_pad * 4),
    )

    q = pl.pallas_call(
        _critic_kernel,
        out_shape=jax.ShapeDtypeStruct((b_pad, 1), jnp.float32),
        grid=grid,
        in_specs=[
            pl.BlockSpec((tb, k_in), batch_blk),
            pl.BlockSpec((k_in, H1_PAD), resident),
            pl.BlockSpec((1, H1_PAD), resident),
            pl.BlockSpec((H1_PAD, H2_PAD), resident),
            pl.BlockSpec((1, H2_PAD), resident),
            pl.BlockSpec((1, H2_PAD), resident),
            pl.BlockSpec(memory_space=pltpu.MemorySpace.SMEM),     # b3 scalar
        ],
        out_specs=pl.BlockSpec((tb, 1), batch_blk),
        compiler_params=pltpu.CompilerParams(
            dimension_semantics=("parallel",),
            vmem_limit_bytes=64 * 1024 * 1024),
        cost_estimate=cost,
    )(sa,
      params["w1"], params["b1"],
      params["w2"], params["b2"],
      params["w3"], params["b3"])
    return q[:b]


def init_critic_params(key, state_dim, action_dim, *, weight_dtype=jnp.bfloat16):
    """PyTorch nn.Linear init (U(-1/sqrt(fan_in), +1/sqrt(fan_in))), then:
    hidden dims zero-padded to 512/384, w1 kept combined over [state;action],
    w3 stored as a [1, H2_PAD] row, b3 as a (1,) SMEM scalar.
    Pass weight_dtype=jnp.float32 for exact parity with the f32 module."""
    def linear(k, fan_in, fan_out):
        kw, kb = jax.random.split(k)
        bound = 1.0 / jnp.sqrt(jnp.float32(fan_in))
        w = jax.random.uniform(kw, (fan_in, fan_out), jnp.float32, -bound, bound)
        bb = jax.random.uniform(kb, (1, fan_out), jnp.float32, -bound, bound)
        return w, bb

    k1, k2, k3 = jax.random.split(key, 3)
    w1, b1 = linear(k1, state_dim + action_dim, H1_LOGICAL)
    w2, b2 = linear(k2, H1_LOGICAL, H2_LOGICAL)
    w3, b3 = linear(k3, H2_LOGICAL, 1)

    pad1 = H1_PAD - H1_LOGICAL
    pad2 = H2_PAD - H2_LOGICAL
    w1 = jnp.pad(w1, ((0, 0), (0, pad1)))
    b1 = jnp.pad(b1, ((0, 0), (0, pad1)))
    w2 = jnp.pad(w2, ((0, pad1), (0, pad2)))
    b2 = jnp.pad(b2, ((0, 0), (0, pad2)))
    w3 = jnp.pad(w3, ((0, pad2), (0, 0)))                          # [H2_PAD, 1]

    return {
        "w1": w1.astype(weight_dtype),                             # [K, H1_PAD]
        "b1": b1,                                                  # f32
        "w2": w2.astype(weight_dtype),
        "b2": b2,                                                  # f32
        "w3": w3.T.astype(weight_dtype),                           # [1, H2_PAD]
        "b3": b3.reshape((1,)),                                    # f32, SMEM
    }


def _reference_forward(state, action, params):
    """Same math as the kernel (weight-dtype operands, f32 acc) in plain JAX."""
    wdt = params["w1"].dtype
    sa = jnp.concatenate([state, action], axis=1).astype(wdt)
    h1 = jnp.dot(sa, params["w1"], preferred_element_type=jnp.float32)
    h1 = jnp.maximum(h1 + params["b1"], 0.0)
    h2 = jnp.dot(h1.astype(wdt), params["w2"],
                 preferred_element_type=jnp.float32)
    h2 = jnp.maximum(h2 + params["b2"], 0.0)
    q = jnp.sum(h2 * params["w3"].astype(jnp.float32), axis=-1, keepdims=True)
    return q + params["b3"][0]


def _reference_forward_f32(state, action, params):
    """Exact original-module (f32) semantics, for a loose sanity check."""
    sa = jnp.concatenate([state, action], axis=1)
    h = jax.nn.relu(sa @ params["w1"].astype(jnp.float32) + params["b1"])
    h = jax.nn.relu(h @ params["w2"].astype(jnp.float32) + params["b2"])
    return h @ params["w3"].astype(jnp.float32).T + params["b3"][0]


if __name__ == "__main__":
    state_dim, action_dim, batch = 16, 4, 8

    key = jax.random.PRNGKey(0)
    kp, ks, ka = jax.random.split(key, 3)
    params = init_critic_params(kp, state_dim, action_dim)
    state = jax.random.normal(ks, (batch, state_dim), jnp.float32)
    action = jax.random.normal(ka, (batch, action_dim), jnp.float32)

    q = critic_forward(state, action, params)
    jax.block_until_ready(q)
    assert q.shape == (batch, 1), q.shape

    # Tight check against a reference computing the same bf16/f32-acc math.
    q_ref = _reference_forward(state, action, params)
    assert jnp.allclose(q, q_ref, atol=2e-3, rtol=2e-3), (q, q_ref)

    # Loose check against exact f32 module semantics (bf16 weight rounding only).
    q_f32 = _reference_forward_f32(state, action, params)
    assert jnp.allclose(q, q_f32, atol=1e-1, rtol=1e-1), (q, q_f32)

    # Also exercise a multi-step batch grid (>= 2 grid steps path).
    big_b = 2048
    kbs, kba = jax.random.split(jax.random.PRNGKey(1))
    big_state = jax.random.normal(kbs, (big_b, state_dim), jnp.float32)
    big_action = jax.random.normal(kba, (big_b, action_dim), jnp.float32)
    q_big = critic_forward(big_state, big_action, params)
    jax.block_until_ready(q_big)
    q_big_ref = _reference_forward(big_state, big_action, params)
    assert q_big.shape == (big_b, 1)
    assert jnp.allclose(q_big, q_big_ref, atol=2e-3, rtol=2e-3)

    print("KERNEL_OK")
</pallas_src>

<mosaic_0001>
module attributes {stable_mosaic.version = 11 : i64} {
  func.func @_critic_kernel(%arg0: i32, %arg1: memref<8x20xbf16, #tpu.memory_space<vmem>>, %arg2: memref<20x512xbf16, #tpu.memory_space<vmem>>, %arg3: memref<1x512xf32, #tpu.memory_space<vmem>>, %arg4: memref<512x384xbf16, #tpu.memory_space<vmem>>, %arg5: memref<1x384xf32, #tpu.memory_space<vmem>>, %arg6: memref<1x384xbf16, #tpu.memory_space<vmem>>, %arg7: memref<1xf32, #tpu.memory_space<smem>>, %arg8: memref<8x1xf32, #tpu.memory_space<vmem>>) attributes {dimension_semantics = [#tpu.dimension_semantics<parallel>], iteration_bounds = array<i64: 1>, scalar_prefetch = 0 : i64, scratch_operands = 0 : i64, tpu.core_type = #tpu.core_type<tc>, window_params = [{transform_indices = @transform_0, window_bounds = array<i64: 8, 20>}, {pipeline_mode = #tpu.pipeline_mode<synchronous>, transform_indices = @transform_1, window_bounds = array<i64: 20, 512>}, {pipeline_mode = #tpu.pipeline_mode<synchronous>, transform_indices = @transform_2, window_bounds = array<i64: 1, 512>}, {pipeline_mode = #tpu.pipeline_mode<synchronous>, transform_indices = @transform_3, window_bounds = array<i64: 512, 384>}, {pipeline_mode = #tpu.pipeline_mode<synchronous>, transform_indices = @transform_4, window_bounds = array<i64: 1, 384>}, {pipeline_mode = #tpu.pipeline_mode<synchronous>, transform_indices = @transform_5, window_bounds = array<i64: 1, 384>}, {transform_indices = @transform_6, window_bounds = array<i64: 1>}, {transform_indices = @transform_7, window_bounds = array<i64: 8, 1>}]} {
    %c0 = arith.constant 0 : index
    %c0_0 = arith.constant 0 : index
    %0 = vector.load %arg1[%c0, %c0_0] : memref<8x20xbf16, #tpu.memory_space<vmem>>, vector<8x20xbf16>
    %c0_1 = arith.constant 0 : index
    %c0_2 = arith.constant 0 : index
    %1 = vector.load %arg2[%c0_1, %c0_2] : memref<20x512xbf16, #tpu.memory_space<vmem>>, vector<20x512xbf16>
    %cst = arith.constant dense<0.000000e+00> : vector<8x512xf32>
    %2 = tpu.matmul %0, %1, %cst {dimension_numbers = #tpu.dot_dimension_numbers<[1], [0], [0], [1], [0, 0, 1, 1], [], []>} : vector<8x20xbf16>, vector<20x512xbf16>, vector<8x512xf32> -> vector<8x512xf32>
    %c0_3 = arith.constant 0 : index
    %c0_4 = arith.constant 0 : index
    %3 = vector.load %arg3[%c0_3, %c0_4] : memref<1x512xf32, #tpu.memory_space<vmem>>, vector<1x512xf32>
    %4 = vector.broadcast %3 : vector<1x512xf32> to vector<8x512xf32>
    %5 = arith.addf %2, %4 : vector<8x512xf32>
    %cst_5 = arith.constant 0.000000e+00 : f32
    %6 = vector.broadcast %cst_5 : f32 to vector<8x512xf32>
    %7 = arith.maximumf %5, %6 : vector<8x512xf32>
    %8 = arith.truncf %7 : vector<8x512xf32> to vector<8x512xbf16>
    %c0_6 = arith.constant 0 : index
    %c0_7 = arith.constant 0 : index
    %9 = vector.load %arg4[%c0_6, %c0_7] : memref<512x384xbf16, #tpu.memory_space<vmem>>, vector<512x384xbf16>
    %cst_8 = arith.constant dense<0.000000e+00> : vector<8x384xf32>
    %10 = tpu.matmul %8, %9, %cst_8 {dimension_numbers = #tpu.dot_dimension_numbers<[1], [0], [0], [1], [0, 0, 1, 1], [], []>} : vector<8x512xbf16>, vector<512x384xbf16>, vector<8x384xf32> -> vector<8x384xf32>
    %c0_9 = arith.constant 0 : index
    %c0_10 = arith.constant 0 : index
    %11 = vector.load %arg5[%c0_9, %c0_10] : memref<1x384xf32, #tpu.memory_space<vmem>>, vector<1x384xf32>
    %12 = vector.broadcast %11 : vector<1x384xf32> to vector<8x384xf32>
    %13 = arith.addf %10, %12 : vector<8x384xf32>
    %cst_11 = arith.constant 0.000000e+00 : f32
    %14 = vector.broadcast %cst_11 : f32 to vector<8x384xf32>
    %15 = arith.maximumf %13, %14 : vector<8x384xf32>
    %c0_12 = arith.constant 0 : index
    %c0_13 = arith.constant 0 : index
    %16 = vector.load %arg6[%c0_12, %c0_13] : memref<1x384xbf16, #tpu.memory_space<vmem>>, vector<1x384xbf16>
    %17 = arith.extf %16 : vector<1x384xbf16> to vector<1x384xf32>
    %18 = vector.broadcast %17 : vector<1x384xf32> to vector<8x384xf32>
    %19 = arith.mulf %15, %18 : vector<8x384xf32>
    %cst_14 = arith.constant dense<0.000000e+00> : vector<8xf32>
    %20 = vector.multi_reduction <add>, %19, %cst_14 [1] : vector<8x384xf32> to vector<8xf32>
    %21 = vector.shape_cast %20 : vector<8xf32> to vector<8x1xf32>
    %c0_15 = arith.constant 0 : index
    %22 = memref.load %arg7[%c0_15] : memref<1xf32, #tpu.memory_space<smem>>
    %23 = vector.broadcast %22 : f32 to vector<8x1xf32>
    %24 = arith.addf %21, %23 : vector<8x1xf32>
    %c0_16 = arith.constant 0 : index
    %c0_17 = arith.constant 0 : index
    %25 = vector.load %arg8[%c0_16, %c0_17] : memref<8x1xf32, #tpu.memory_space<vmem>>, vector<8x1xf32>
    tpu.vector_store %arg8[%c0_16, %c0_17], %24 {strides = array<i32>} : memref<8x1xf32, #tpu.memory_space<vmem>>, vector<8x1xf32>,
    return
  }
  func.func @transform_0(%arg0: i32) -> (i32, i32) {
    %c0_i32 = arith.constant 0 : i32
    %c0_i32_0 = arith.constant 0 : i32
    return %arg0, %c0_i32 : i32, i32
  }
  func.func @transform_1(%arg0: i32) -> (i32, i32) {
    %c0_i32 = arith.constant 0 : i32
    %c0_i32_0 = arith.constant 0 : i32
    %c0_i32_1 = arith.constant 0 : i32
    return %c0_i32, %c0_i32_0 : i32, i32
  }
  func.func @transform_2(%arg0: i32) -> (i32, i32) {
    %c0_i32 = arith.constant 0 : i32
    %c0_i32_0 = arith.constant 0 : i32
    %c0_i32_1 = arith.constant 0 : i32
    return %c0_i32, %c0_i32_0 : i32, i32
  }
  func.func @transform_3(%arg0: i32) -> (i32, i32) {
    %c0_i32 = arith.constant 0 : i32
    %c0_i32_0 = arith.constant 0 : i32
    %c0_i32_1 = arith.constant 0 : i32
    return %c0_i32, %c0_i32_0 : i32, i32
  }
  func.func @transform_4(%arg0: i32) -> (i32, i32) {
    %c0_i32 = arith.constant 0 : i32
    %c0_i32_0 = arith.constant 0 : i32
    %c0_i32_1 = arith.constant 0 : i32
    return %c0_i32, %c0_i32_0 : i32, i32
  }
  func.func @transform_5(%arg0: i32) -> (i32, i32) {
    %c0_i32 = arith.constant 0 : i32
    %c0_i32_0 = arith.constant 0 : i32
    %c0_i32_1 = arith.constant 0 : i32
    return %c0_i32, %c0_i32_0 : i32, i32
  }
  func.func @transform_6(%arg0: i32) -> i32 {
    %c0_i32 = arith.constant 0 : i32
    %c0_i32_0 = arith.constant 0 : i32
    return %c0_i32 : i32
  }
  func.func @transform_7(%arg0: i32) -> (i32, i32) {
    %c0_i32 = arith.constant 0 : i32
    %c0_i32_0 = arith.constant 0 : i32
    return %arg0, %c0_i32 : i32, i32
  }
}

</mosaic_0001>

<llo_original>
// kernel: critic_forward.1
$region0: #{critic_forward.1}
  #allocation0 [shape = 'u32[]', space=smem, size = 0x4, offset = 0x4, fixed_abs, tag = 'smem constant byte address 0x4 - core index']
  #allocation1 [shape = 'u32[72,128]{1,0:T(1,128)}', space=vmem, size = 0x9000, scoped, tag = 'internal scratch']
  #allocation2 [shape = 'f32[1]{0:T(128)S(6)}', space=smem, size = 0x200, scoped, tag = 'scoped memory for critic_forward.1']
  %s0 = inlined_call_operand.vmem [shape: bf16[8,20], index: 0, kind: input, shape index: {}]
  %s1 = inlined_call_operand.hbm [shape: bf16[20,512], index: 1, kind: input, shape index: {}]
  %s2 = inlined_call_operand.vmem [shape: f32[1,512], index: 2, kind: input, shape index: {}]
  %s3 = inlined_call_operand.hbm [shape: bf16[512,384], index: 3, kind: input, shape index: {}]
  %s4 = inlined_call_operand.vmem [shape: f32[1,384], index: 4, kind: input, shape index: {}]
  %s5 = inlined_call_operand.vmem [shape: bf16[1,384], index: 5, kind: input, shape index: {}]
  %s6 = inlined_call_operand.<no memory space> [shape: f32[1], index: 6, kind: input, shape index: {}]
  %s7 = inlined_call_operand.vmem [shape: f32[8,1], index: 7, kind: output, shape index: {}]
  %s8 = sld [smem:[#allocation0]]
  $region46: #{critic_forward.1} parent=0
    _
  %s10 = ssub.s32 1, %s8
  %s11 = scalar_select 0, %s10, %s8
  %12 = sst [smem:[#allocation2]] %s6
  $region1: #{critic_forward.1} parent=0
    #allocation3 [shape = 'u8[24576]{0}', space=vmem, size = 0x6000, scoped, tag = 'input window, operand 1, single buffered']
    #allocation4 [shape = 's32[1]{0}', space=sflag, size = 0x4, scoped, tag = 'scoped memory for critic_forward.1']
    #allocation5 [shape = 'u8[393216]{0}', space=vmem, size = 0x60000, scoped, tag = 'input window, operand 3, single buffered']
    #allocation6 [shape = 's32[1]{0}', space=sflag, size = 0x4, scoped, tag = 'scoped memory for critic_forward.1']
    %13 = vsyncpa [#allocation4], 0
    %14 = vsyncpa [#allocation6], 0
    // Predicated region
    $region2: #{critic_forward.1} parent=1 // pred_check
      _
    $region3: #{critic_forward.1} parent=1 // pred_check_branch
      %16 = sbr.rel (0) target = $region5
    $region4: #{critic_forward.1} parent=1 // pred_region
      _
    $region5: #{critic_forward.1} parent=1 // pred_fallthru
      _
    // Predicated region
    $region6: #{critic_forward.1} parent=1 // pred_check
      _
    $region7: #{critic_forward.1} parent=1 // pred_check_branch
      %18 = sbr.rel (0) target = $region9
    $region8: #{critic_forward.1} parent=1 // pred_region
      %20 = vsyncadd [#allocation4], 0
      %s21 = sshll.u32 %s1, 4
      %s22 = int_to_ptr.hbm [resolvable:$true] %s21
      %s23 = sshll.u32 [#allocation3], 4
      %s24 = int_to_ptr.vmem [resolvable:$true] %s23
      %29 = dma.hbm_to_vmem [thread:$0]  %s22, 768, %s24, [#allocation4], 256, 256, 16
    $region9: #{critic_forward.1} parent=1 // pred_fallthru
      _
    // Predicated region
    $region10: #{critic_forward.1} parent=1 // pred_check
      _
    $region11: #{critic_forward.1} parent=1 // pred_check_branch
      %31 = sbr.rel (0) target = $region13
    $region12: #{critic_forward.1} parent=1 // pred_region
      _
    $region13: #{critic_forward.1} parent=1 // pred_fallthru
      _
    // Predicated region
    $region14: #{critic_forward.1} parent=1 // pred_check
      _
    $region15: #{critic_forward.1} parent=1 // pred_check_branch
      %33 = sbr.rel (0) target = $region17
    $region16: #{critic_forward.1} parent=1 // pred_region
      %35 = vsyncadd [#allocation6], 0
      %s36 = sshll.u32 %s3, 4
      %s37 = int_to_ptr.hbm [resolvable:$true] %s36
      %s38 = sshll.u32 [#allocation5], 4
      %s39 = int_to_ptr.vmem [resolvable:$true] %s38
      %44 = dma.hbm_to_vmem [thread:$0]  %s37, 12288, %s39, [#allocation6], 192, 192, 12
    $region17: #{critic_forward.1} parent=1 // pred_fallthru
      _
    // Predicated region
    $region18: #{critic_forward.1} parent=1 // pred_check
      _
    $region19: #{critic_forward.1} parent=1 // pred_check_branch
      %46 = sbr.rel (0) target = $region21
    $region20: #{critic_forward.1} parent=1 // pred_region
      _
    $region21: #{critic_forward.1} parent=1 // pred_fallthru
      _
    // Predicated region
    $region22: #{critic_forward.1} parent=1 // pred_check
      _
    $region23: #{critic_forward.1} parent=1 // pred_check_branch
      %48 = sbr.rel (0) target = $region25
    $region24: #{critic_forward.1} parent=1 // pred_region
      _
    $region25: #{critic_forward.1} parent=1 // pred_fallthru
      _
    // Predicated region
    $region26: #{critic_forward.1} parent=1 // pred_check
      _
    $region27: #{critic_forward.1} parent=1 // pred_check_branch
      %50 = sbr.rel (0) target = $region29
    $region28: #{critic_forward.1} parent=1 // pred_region
      _
    $region29: #{critic_forward.1} parent=1 // pred_fallthru
      _
    // Predicated region
    $region30: #{critic_forward.1} parent=1 // pred_check
      _
    $region31: #{critic_forward.1} parent=1 // pred_check_branch
      %52 = sbr.rel (0) target = $region33
    $region32: #{critic_forward.1} parent=1 // pred_region
      %54 = dma.done [#allocation4], 768
    $region33: #{critic_forward.1} parent=1 // pred_fallthru
      _
    // Predicated region
    $region34: #{critic_forward.1} parent=1 // pred_check
      _
    $region35: #{critic_forward.1} parent=1 // pred_check_branch
      %56 = sbr.rel (0) target = $region37
    $region36: #{critic_forward.1} parent=1 // pred_region
      %58 = dma.done [#allocation6], 12288
    $region37: #{critic_forward.1} parent=1 // pred_fallthru
      _
    %v60 = vld [vmem:[%s0] sm:$0xf]
    %v61 = vld [vmem:[#allocation3] sm:$0xff]
    %v62 = vld [vmem:[#allocation3 + $0x8] sm:$0xff]
    %v63 = vld [vmem:[#allocation3 + $0x10] sm:$0xff]
    %v64 = vld [vmem:[#allocation3 + $0x18] sm:$0xff]
    %v65 = vld [vmem:[#allocation3 + $0x20] sm:$0x33]
    %v66 = vld [vmem:[#allocation3 + $0x28] sm:$0x33]
    %v67 = vld [vmem:[%s2] sm:$0xf]
    %v69 = vperm.slane %v67, 0
    %v70 = vperm.slane %v67, 1
    %v71 = vperm.slane %v67, 2
    %v72 = vperm.slane %v67, 3
    %v83 = vunpack.c.l.b16 %v61
    %v84 = vunpack.c.h.b16 %v61
    %v85 = vunpack.c.l.b16 %v62
    %v86 = vunpack.c.h.b16 %v62
    %v87 = vunpack.c.l.b16 %v63
    %v88 = vunpack.c.h.b16 %v63
    %v89 = vunpack.c.l.b16 %v64
    %v90 = vunpack.c.h.b16 %v64
    %v91 = vunpack.c.l.b16 %v65
    %v92 = vunpack.c.h.b16 %v65
    %v93 = vunpack.c.l.b16 %v66
    %v94 = vunpack.c.h.b16 %v66
    %v95 = vpack.c.b16 %v87, %v83
    %v96 = vpack.c.b16 %v88, %v84
    %v97 = vpack.c.b16 %v89, %v85
    %v98 = vpack.c.b16 %v90, %v86
    %v99 = vpack.c.b16 %v91, %v91
    %v100 = vpack.c.b16 %v92, %v92
    %v101 = vpack.c.b16 %v93, %v93
    %v102 = vpack.c.b16 %v94, %v94
    %vm107 = vcmask 162816
    %v109 = vsel %vm107, %v60, 0
    %vm111 = vcmask 1041408
    %v113 = vsel %vm111, %v99, 0
    %v116 = vsel %vm111, %v100, 0
    %v119 = vsel %vm111, %v101, 0
    %v122 = vsel %vm111, %v102, 0
    %124 = vmatpush.bf16.msra.mxu0 0
    %125 = vmatpush.bf16.msra.mxu0 0
    %126 = vmatpush.bf16.msra.mxu0 0
    %127 = vmatpush.bf16.msra.mxu0 0
    %128 = vmatpush.bf16.msra.mxu0 0
    %129 = vmatpush.bf16.msra.mxu0 0
    %130 = vmatpush.bf16.msra.mxu0 %v113
    %131 = vmatpush.bf16.msra.mxu0 %v95
    %132 = vmatmul.bf16.gmra.mxu0 %v109
    %v133 = vpop.f32.mrf.mxu0
    %v134 = vadd.f32 %v69, %v133
    %v135 = vpop.f32.mrf.mxu0
    %136 = vdwg.mxu0
    %137 = vmatpush.bf16.msra.mxu0 0
    %138 = vmatpush.bf16.msra.mxu0 0
    %139 = vmatpush.bf16.msra.mxu0 0
    %140 = vmatpush.bf16.msra.mxu0 0
    %141 = vmatpush.bf16.msra.mxu0 0
    %142 = vmatpush.bf16.msra.mxu0 0
    %143 = vmatpush.bf16.msra.mxu0 %v116
    %144 = vmatpush.bf16.msra.mxu0 %v96
    %145 = vmatmul.bf16.gmra.mxu0 %v109
    %v146 = vpop.f32.mrf.mxu0
    %v147 = vadd.f32 %v70, %v146
    %v148 = vpop.f32.mrf.mxu0
    %149 = vdwg.mxu0
    %150 = vmatpush.bf16.msra.mxu0 0
    %151 = vmatpush.bf16.msra.mxu0 0
    %152 = vmatpush.bf16.msra.mxu0 0
    %153 = vmatpush.bf16.msra.mxu0 0
    %154 = vmatpush.bf16.msra.mxu0 0
    %155 = vmatpush.bf16.msra.mxu0 0
    %156 = vmatpush.bf16.msra.mxu0 %v119
    %157 = vmatpush.bf16.msra.mxu0 %v97
    %158 = vmatmul.bf16.gmra.mxu0 %v109
    %v159 = vpop.f32.mrf.mxu0
    %v160 = vadd.f32 %v71, %v159
    %v161 = vpop.f32.mrf.mxu0
    %162 = vdwg.mxu0
    %163 = vmatpush.bf16.msra.mxu0 0
    %164 = vmatpush.bf16.msra.mxu0 0
    %165 = vmatpush.bf16.msra.mxu0 0
    %166 = vmatpush.bf16.msra.mxu0 0
    %167 = vmatpush.bf16.msra.mxu0 0
    %168 = vmatpush.bf16.msra.mxu0 0
    %169 = vmatpush.bf16.msra.mxu0 %v122
    %170 = vmatpush.bf16.msra.mxu0 %v98
    %171 = vmatmul.bf16.gmra.mxu0 %v109
    %v172 = vpop.f32.mrf.mxu0
    %v173 = vadd.f32 %v72, %v172
    %v174 = vpop.f32.mrf.mxu0
    %175 = vdwg.mxu0
    %v176 = vmax.f32 %v134, 0.0
    %v177 = vmax.f32 %v147, 0.0
    %v178 = vmax.f32 %v160, 0.0
    %v179 = vmax.f32 %v173, 0.0
    %v180 = vpack.c.bf16 %v176, %v176
    %v181 = vpack.c.bf16 %v177, %v177
    %v182 = vpack.c.bf16 %v178, %v178
    %v183 = vpack.c.bf16 %v179, %v179
    %v184 = vld [vmem:[#allocation5] sm:$0xff]
    %v185 = vld [vmem:[#allocation5 + $0x8] sm:$0xf]
    %v186 = vld [vmem:[#allocation5 + $0xc] sm:$0xff]
    %v187 = vld [vmem:[#allocation5 + $0x14] sm:$0xf]
    %v188 = vld [vmem:[#allocation5 + $0x18] sm:$0xff]
    %v189 = vld [vmem:[#allocation5 + $0x20] sm:$0xf]
    %v190 = vld [vmem:[#allocation5 + $0x24] sm:$0xff]
    %v191 = vld [vmem:[#allocation5 + $0x2c] sm:$0xf]
    %v192 = vld [vmem:[#allocation5 + $0x30] sm:$0xff]
    %v193 = vld [vmem:[#allocation5 + $0x38] sm:$0xf]
    %v194 = vld [vmem:[#allocation5 + $0x3c] sm:$0xff]
    %v195 = vld [vmem:[#allocation5 + $0x44] sm:$0xf]
    %v196 = vld [vmem:[#allocation5 + $0x48] sm:$0xff]
    %v197 = vld [vmem:[#allocation5 + $0x50] sm:$0xf]
    %v198 = vld [vmem:[#allocation5 + $0x54] sm:$0xff]
    %v199 = vld [vmem:[#allocation5 + $0x5c] sm:$0xf]
    %v200 = vld [vmem:[#allocation5 + $0x60] sm:$0xff]
    %v201 = vld [vmem:[#allocation5 + $0x68] sm:$0xf]
    %v202 = vld [vmem:[#allocation5 + $0x6c] sm:$0xff]
    %v203 = vld [vmem:[#allocation5 + $0x74] sm:$0xf]
    %v204 = vld [vmem:[#allocation5 + $0x78] sm:$0xff]
    %v205 = vld [vmem:[#allocation5 + $0x80] sm:$0xf]
    %v206 = vld [vmem:[#allocation5 + $0x84] sm:$0xff]
    %v207 = vld [vmem:[#allocation5 + $0x8c] sm:$0xf]
    %v208 = vld [vmem:[#allocation5 + $0x90] sm:$0xff]
    %v209 = vld [vmem:[#allocation5 + $0x98] sm:$0xf]
    %v210 = vld [vmem:[#allocation5 + $0x9c] sm:$0xff]
    %v211 = vld [vmem:[#allocation5 + $0xa4] sm:$0xf]
    %v212 = vld [vmem:[#allocation5 + $0xa8] sm:$0xff]
    %v213 = vld [vmem:[#allocation5 + $0xb0] sm:$0xf]
    %v214 = vld [vmem:[#allocation5 + $0xb4] sm:$0xff]
    %v215 = vld [vmem:[#allocation5 + $0xbc] sm:$0xf]
    %v216 = vld [vmem:[#allocation5 + $0xc0] sm:$0xff]
    %v217 = vld [vmem:[#allocation5 + $0xc8] sm:$0xf]
    %v218 = vld [vmem:[#allocation5 + $0xcc] sm:$0xff]
    %v219 = vld [vmem:[#allocation5 + $0xd4] sm:$0xf]
    %v220 = vld [vmem:[#allocation5 + $0xd8] sm:$0xff]
    %v221 = vld [vmem:[#allocation5 + $0xe0] sm:$0xf]
    %v222 = vld [vmem:[#allocation5 + $0xe4] sm:$0xff]
    %v223 = vld [vmem:[#allocation5 + $0xec] sm:$0xf]
    %v224 = vld [vmem:[#allocation5 + $0xf0] sm:$0xff]
    %v225 = vld [vmem:[#allocation5 + $0xf8] sm:$0xf]
    %v226 = vld [vmem:[#allocation5 + $0xfc] sm:$0xff]
    %v227 = vld [vmem:[#allocation5 + $0x104] sm:$0xf]
    %v228 = vld [vmem:[#allocation5 + $0x108] sm:$0xff]
    %v229 = vld [vmem:[#allocation5 + $0x110] sm:$0xf]
    %v230 = vld [vmem:[#allocation5 + $0x114] sm:$0xff]
    %v231 = vld [vmem:[#allocation5 + $0x11c] sm:$0xf]
    %v232 = vld [vmem:[#allocation5 + $0x120] sm:$0xff]
    %v233 = vld [vmem:[#allocation5 + $0x128] sm:$0xf]
    %v234 = vld [vmem:[#allocation5 + $0x12c] sm:$0xff]
    %v235 = vld [vmem:[#allocation5 + $0x134] sm:$0xf]
    %v236 = vld [vmem:[#allocation5 + $0x138] sm:$0xff]
    %v237 = vld [vmem:[#allocation5 + $0x140] sm:$0xf]
    %v238 = vld [vmem:[#allocation5 + $0x144] sm:$0xff]
    %v239 = vld [vmem:[#allocation5 + $0x14c] sm:$0xf]
    %v240 = vld [vmem:[#allocation5 + $0x150] sm:$0xff]
    %v241 = vld [vmem:[#allocation5 + $0x158] sm:$0xf]
    %v242 = vld [vmem:[#allocation5 + $0x15c] sm:$0xff]
    %v243 = vld [vmem:[#allocation5 + $0x164] sm:$0xf]
    %v244 = vld [vmem:[#allocation5 + $0x168] sm:$0xff]
    %v245 = vld [vmem:[#allocation5 + $0x170] sm:$0xf]
    %v246 = vld [vmem:[#allocation5 + $0x174] sm:$0xff]
    %v247 = vld [vmem:[#allocation5 + $0x17c] sm:$0xf]
    %v248 = vld [vmem:[#allocation5 + $0x180] sm:$0xff]
    %v249 = vld [vmem:[#allocation5 + $0x188] sm:$0xf]
    %v250 = vld [vmem:[#allocation5 + $0x18c] sm:$0xff]
    %v251 = vld [vmem:[#allocation5 + $0x194] sm:$0xf]
    %v252 = vld [vmem:[#allocation5 + $0x198] sm:$0xff]
    %v253 = vld [vmem:[#allocation5 + $0x1a0] sm:$0xf]
    %v254 = vld [vmem:[#allocation5 + $0x1a4] sm:$0xff]
    %v255 = vld [vmem:[#allocation5 + $0x1ac] sm:$0xf]
    %v256 = vld [vmem:[#allocation5 + $0x1b0] sm:$0xff]
    %v257 = vld [vmem:[#allocation5 + $0x1b8] sm:$0xf]
    %v258 = vld [vmem:[#allocation5 + $0x1bc] sm:$0xff]
    %v259 = vld [vmem:[#allocation5 + $0x1c4] sm:$0xf]
    %v260 = vld [vmem:[#allocation5 + $0x1c8] sm:$0xff]
    %v261 = vld [vmem:[#allocation5 + $0x1d0] sm:$0xf]
    %v262 = vld [vmem:[#allocation5 + $0x1d4] sm:$0xff]
    %v263 = vld [vmem:[#allocation5 + $0x1dc] sm:$0xf]
    %v264 = vld [vmem:[#allocation5 + $0x1e0] sm:$0xff]
    %v265 = vld [vmem:[#allocation5 + $0x1e8] sm:$0xf]
    %v266 = vld [vmem:[#allocation5 + $0x1ec] sm:$0xff]
    %v267 = vld [vmem:[#allocation5 + $0x1f4] sm:$0xf]
    %v268 = vld [vmem:[#allocation5 + $0x1f8] sm:$0xff]
    %v269 = vld [vmem:[#allocation5 + $0x200] sm:$0xf]
    %v270 = vld [vmem:[#allocation5 + $0x204] sm:$0xff]
    %v271 = vld [vmem:[#allocation5 + $0x20c] sm:$0xf]
    %v272 = vld [vmem:[#allocation5 + $0x210] sm:$0xff]
    %v273 = vld [vmem:[#allocation5 + $0x218] sm:$0xf]
    %v274 = vld [vmem:[#allocation5 + $0x21c] sm:$0xff]
    %v275 = vld [vmem:[#allocation5 + $0x224] sm:$0xf]
    %v276 = vld [vmem:[#allocation5 + $0x228] sm:$0xff]
    %v277 = vld [vmem:[#allocation5 + $0x230] sm:$0xf]
    %v278 = vld [vmem:[#allocation5 + $0x234] sm:$0xff]
    %v279 = vld [vmem:[#allocation5 + $0x23c] sm:$0xf]
    %v280 = vld [vmem:[#allocation5 + $0x240] sm:$0xff]
    %v281 = vld [vmem:[#allocation5 + $0x248] sm:$0xf]
    %v282 = vld [vmem:[#allocation5 + $0x24c] sm:$0xff]
    %v283 = vld [vmem:[#allocation5 + $0x254] sm:$0xf]
    %v284 = vld [vmem:[#allocation5 + $0x258] sm:$0xff]
    %v285 = vld [vmem:[#allocation5 + $0x260] sm:$0xf]
    %v286 = vld [vmem:[#allocation5 + $0x264] sm:$0xff]
    %v287 = vld [vmem:[#allocation5 + $0x26c] sm:$0xf]
    %v288 = vld [vmem:[#allocation5 + $0x270] sm:$0xff]
    %v289 = vld [vmem:[#allocation5 + $0x278] sm:$0xf]
    %v290 = vld [vmem:[#allocation5 + $0x27c] sm:$0xff]
    %v291 = vld [vmem:[#allocation5 + $0x284] sm:$0xf]
    %v292 = vld [vmem:[#allocation5 + $0x288] sm:$0xff]
    %v293 = vld [vmem:[#allocation5 + $0x290] sm:$0xf]
    %v294 = vld [vmem:[#allocation5 + $0x294] sm:$0xff]
    %v295 = vld [vmem:[#allocation5 + $0x29c] sm:$0xf]
    %v296 = vld [vmem:[#allocation5 + $0x2a0] sm:$0xff]
    %v297 = vld [vmem:[#allocation5 + $0x2a8] sm:$0xf]
    %v298 = vld [vmem:[#allocation5 + $0x2ac] sm:$0xff]
    %v299 = vld [vmem:[#allocation5 + $0x2b4] sm:$0xf]
    %v300 = vld [vmem:[#allocation5 + $0x2b8] sm:$0xff]
    %v301 = vld [vmem:[#allocation5 + $0x2c0] sm:$0xf]
    %v302 = vld [vmem:[#allocation5 + $0x2c4] sm:$0xff]
    %v303 = vld [vmem:[#allocation5 + $0x2cc] sm:$0xf]
    %v304 = vld [vmem:[#allocation5 + $0x2d0] sm:$0xff]
    %v305 = vld [vmem:[#allocation5 + $0x2d8] sm:$0xf]
    %v306 = vld [vmem:[#allocation5 + $0x2dc] sm:$0xff]
    %v307 = vld [vmem:[#allocation5 + $0x2e4] sm:$0xf]
    %v308 = vld [vmem:[#allocation5 + $0x2e8] sm:$0xff]
    %v309 = vld [vmem:[#allocation5 + $0x2f0] sm:$0xf]
    %v310 = vld [vmem:[#allocation5 + $0x2f4] sm:$0xff]
    %v311 = vld [vmem:[#allocation5 + $0x2fc] sm:$0xf]
    %v312 = vld [vmem:[%s4] sm:$0x7]
    %v314 = vperm.slane %v312, 0
    %v315 = vperm.slane %v312, 1
    %v316 = vperm.slane %v312, 2
    %v448 = vunpack.c.l.b16 %v184
    %v449 = vunpack.c.h.b16 %v184
    %v450 = vunpack.c.l.b16 %v185
    %v451 = vunpack.c.l.b16 %v186
    %v452 = vunpack.c.h.b16 %v186
    %v453 = vunpack.c.l.b16 %v187
    %v454 = vunpack.c.l.b16 %v188
    %v455 = vunpack.c.h.b16 %v188
    %v456 = vunpack.c.l.b16 %v189
    %v457 = vunpack.c.l.b16 %v190
    %v458 = vunpack.c.h.b16 %v190
    %v459 = vunpack.c.l.b16 %v191
    %v460 = vunpack.c.l.b16 %v192
    %v461 = vunpack.c.h.b16 %v192
    %v462 = vunpack.c.l.b16 %v193
    %v463 = vunpack.c.l.b16 %v194
    %v464 = vunpack.c.h.b16 %v194
    %v465 = vunpack.c.l.b16 %v195
    %v466 = vunpack.c.l.b16 %v196
    %v467 = vunpack.c.h.b16 %v196
    %v468 = vunpack.c.l.b16 %v197
    %v469 = vunpack.c.l.b16 %v198
    %v470 = vunpack.c.h.b16 %v198
    %v471 = vunpack.c.l.b16 %v199
    %v472 = vunpack.c.l.b16 %v200
    %v473 = vunpack.c.h.b16 %v200
    %v474 = vunpack.c.l.b16 %v201
    %v475 = vunpack.c.l.b16 %v202
    %v476 = vunpack.c.h.b16 %v202
    %v477 = vunpack.c.l.b16 %v203
    %v478 = vunpack.c.l.b16 %v204
    %v479 = vunpack.c.h.b16 %v204
    %v480 = vunpack.c.l.b16 %v205
    %v481 = vunpack.c.l.b16 %v206
    %v482 = vunpack.c.h.b16 %v206
    %v483 = vunpack.c.l.b16 %v207
    %v484 = vunpack.c.l.b16 %v208
    %v485 = vunpack.c.h.b16 %v208
    %v486 = vunpack.c.l.b16 %v209
    %v487 = vunpack.c.l.b16 %v210
    %v488 = vunpack.c.h.b16 %v210
    %v489 = vunpack.c.l.b16 %v211
    %v490 = vunpack.c.l.b16 %v212
    %v491 = vunpack.c.h.b16 %v212
    %v492 = vunpack.c.l.b16 %v213
    %v493 = vunpack.c.l.b16 %v214
    %v494 = vunpack.c.h.b16 %v214
    %v495 = vunpack.c.l.b16 %v215
    %v496 = vunpack.c.l.b16 %v216
    %v497 = vunpack.c.h.b16 %v216
    %v498 = vunpack.c.l.b16 %v217
    %v499 = vunpack.c.l.b16 %v218
    %v500 = vunpack.c.h.b16 %v218
    %v501 = vunpack.c.l.b16 %v219
    %v502 = vunpack.c.l.b16 %v220
    %v503 = vunpack.c.h.b16 %v220
    %v504 = vunpack.c.l.b16 %v221
    %v505 = vunpack.c.l.b16 %v222
    %v506 = vunpack.c.h.b16 %v222
    %v507 = vunpack.c.l.b16 %v223
    %v508 = vunpack.c.l.b16 %v224
    %v509 = vunpack.c.h.b16 %v224
    %v510 = vunpack.c.l.b16 %v225
    %v511 = vunpack.c.l.b16 %v226
    %v512 = vunpack.c.h.b16 %v226
    %v513 = vunpack.c.l.b16 %v227
    %v514 = vunpack.c.l.b16 %v228
    %v515 = vunpack.c.h.b16 %v228
    %v516 = vunpack.c.l.b16 %v229
    %v517 = vunpack.c.l.b16 %v230
    %v518 = vunpack.c.h.b16 %v230
    %v519 = vunpack.c.l.b16 %v231
    %v520 = vunpack.c.l.b16 %v232
    %v521 = vunpack.c.h.b16 %v232
    %v522 = vunpack.c.l.b16 %v233
    %v523 = vunpack.c.l.b16 %v234
    %v524 = vunpack.c.h.b16 %v234
    %v525 = vunpack.c.l.b16 %v235
    %v526 = vunpack.c.l.b16 %v236
    %v527 = vunpack.c.h.b16 %v236
    %v528 = vunpack.c.l.b16 %v237
    %v529 = vunpack.c.l.b16 %v238
    %v530 = vunpack.c.h.b16 %v238
    %v531 = vunpack.c.l.b16 %v239
    %v532 = vunpack.c.l.b16 %v240
    %v533 = vunpack.c.h.b16 %v240
    %v534 = vunpack.c.l.b16 %v241
    %v535 = vunpack.c.l.b16 %v242
    %v536 = vunpack.c.h.b16 %v242
    %v537 = vunpack.c.l.b16 %v243
    %v538 = vunpack.c.l.b16 %v244
    %v539 = vunpack.c.h.b16 %v244
    %v540 = vunpack.c.l.b16 %v245
    %v541 = vunpack.c.l.b16 %v246
    %v542 = vunpack.c.h.b16 %v246
    %v543 = vunpack.c.l.b16 %v247
    %v544 = vunpack.c.l.b16 %v248
    %v545 = vunpack.c.h.b16 %v248
    %v546 = vunpack.c.l.b16 %v249
    %v547 = vunpack.c.l.b16 %v250
    %v548 = vunpack.c.h.b16 %v250
    %v549 = vunpack.c.l.b16 %v251
    %v550 = vunpack.c.l.b16 %v252
    %v551 = vunpack.c.h.b16 %v252
    %v552 = vunpack.c.l.b16 %v253
    %v553 = vunpack.c.l.b16 %v254
    %v554 = vunpack.c.h.b16 %v254
    %v555 = vunpack.c.l.b16 %v255
    %v556 = vunpack.c.l.b16 %v256
    %v557 = vunpack.c.h.b16 %v256
    %v558 = vunpack.c.l.b16 %v257
    %v559 = vunpack.c.l.b16 %v258
    %v560 = vunpack.c.h.b16 %v258
    %v561 = vunpack.c.l.b16 %v259
    %v562 = vunpack.c.l.b16 %v260
    %v563 = vunpack.c.h.b16 %v260
    %v564 = vunpack.c.l.b16 %v261
    %v565 = vunpack.c.l.b16 %v262
    %v566 = vunpack.c.h.b16 %v262
    %v567 = vunpack.c.l.b16 %v263
    %v568 = vunpack.c.l.b16 %v264
    %v569 = vunpack.c.h.b16 %v264
    %v570 = vunpack.c.l.b16 %v265
    %v571 = vunpack.c.l.b16 %v266
    %v572 = vunpack.c.h.b16 %v266
    %v573 = vunpack.c.l.b16 %v267
    %v574 = vunpack.c.l.b16 %v268
    %v575 = vunpack.c.h.b16 %v268
    %v576 = vunpack.c.l.b16 %v269
    %v577 = vunpack.c.l.b16 %v270
    %v578 = vunpack.c.h.b16 %v270
    %v579 = vunpack.c.l.b16 %v271
    %v580 = vunpack.c.l.b16 %v272
    %v581 = vunpack.c.h.b16 %v272
    %v582 = vunpack.c.l.b16 %v273
    %v583 = vunpack.c.l.b16 %v274
    %v584 = vunpack.c.h.b16 %v274
    %v585 = vunpack.c.l.b16 %v275
    %v586 = vunpack.c.l.b16 %v276
    %v587 = vunpack.c.h.b16 %v276
    %v588 = vunpack.c.l.b16 %v277
    %v589 = vunpack.c.l.b16 %v278
    %v590 = vunpack.c.h.b16 %v278
    %v591 = vunpack.c.l.b16 %v279
    %v592 = vunpack.c.l.b16 %v280
    %v593 = vunpack.c.h.b16 %v280
    %v594 = vunpack.c.l.b16 %v281
    %v595 = vunpack.c.l.b16 %v282
    %v596 = vunpack.c.h.b16 %v282
    %v597 = vunpack.c.l.b16 %v283
    %v598 = vunpack.c.l.b16 %v284
    %v599 = vunpack.c.h.b16 %v284
    %v600 = vunpack.c.l.b16 %v285
    %v601 = vunpack.c.l.b16 %v286
    %v602 = vunpack.c.h.b16 %v286
    %v603 = vunpack.c.l.b16 %v287
    %v604 = vunpack.c.l.b16 %v288
    %v605 = vunpack.c.h.b16 %v288
    %v606 = vunpack.c.l.b16 %v289
    %v607 = vunpack.c.l.b16 %v290
    %v608 = vunpack.c.h.b16 %v290
    %v609 = vunpack.c.l.b16 %v291
    %v610 = vunpack.c.l.b16 %v292
    %v611 = vunpack.c.h.b16 %v292
    %v612 = vunpack.c.l.b16 %v293
    %v613 = vunpack.c.l.b16 %v294
    %v614 = vunpack.c.h.b16 %v294
    %v615 = vunpack.c.l.b16 %v295
    %v616 = vunpack.c.l.b16 %v296
    %v617 = vunpack.c.h.b16 %v296
    %v618 = vunpack.c.l.b16 %v297
    %v619 = vunpack.c.l.b16 %v298
    %v620 = vunpack.c.h.b16 %v298
    %v621 = vunpack.c.l.b16 %v299
    %v622 = vunpack.c.l.b16 %v300
    %v623 = vunpack.c.h.b16 %v300
    %v624 = vunpack.c.l.b16 %v301
    %v625 = vunpack.c.l.b16 %v302
    %v626 = vunpack.c.h.b16 %v302
    %v627 = vunpack.c.l.b16 %v303
    %v628 = vunpack.c.l.b16 %v304
    %v629 = vunpack.c.h.b16 %v304
    %v630 = vunpack.c.l.b16 %v305
    %v631 = vunpack.c.l.b16 %v306
    %v632 = vunpack.c.h.b16 %v306
    %v633 = vunpack.c.l.b16 %v307
    %v634 = vunpack.c.l.b16 %v308
    %v635 = vunpack.c.h.b16 %v308
    %v636 = vunpack.c.l.b16 %v309
    %v637 = vunpack.c.l.b16 %v310
    %v638 = vunpack.c.h.b16 %v310
    %v639 = vunpack.c.l.b16 %v311
    %v640 = vpack.c.b16 %v451, %v448
    %v641 = vpack.c.b16 %v452, %v449
    %v642 = vpack.c.b16 %v453, %v450
    %v643 = vpack.c.b16 %v457, %v454
    %v644 = vpack.c.b16 %v458, %v455
    %v645 = vpack.c.b16 %v459, %v456
    %v646 = vpack.c.b16 %v463, %v460
    %v647 = vpack.c.b16 %v464, %v461
    %v648 = vpack.c.b16 %v465, %v462
    %v649 = vpack.c.b16 %v469, %v466
    %v650 = vpack.c.b16 %v470, %v467
    %v651 = vpack.c.b16 %v471, %v468
    %v652 = vpack.c.b16 %v475, %v472
    %v653 = vpack.c.b16 %v476, %v473
    %v654 = vpack.c.b16 %v477, %v474
    %v655 = vpack.c.b16 %v481, %v478
    %v656 = vpack.c.b16 %v482, %v479
    %v657 = vpack.c.b16 %v483, %v480
    %v658 = vpack.c.b16 %v487, %v484
    %v659 = vpack.c.b16 %v488, %v485
    %v660 = vpack.c.b16 %v489, %v486
    %v661 = vpack.c.b16 %v493, %v490
    %v662 = vpack.c.b16 %v494, %v491
    %v663 = vpack.c.b16 %v495, %v492
    %v664 = vpack.c.b16 %v499, %v496
    %v665 = vpack.c.b16 %v500, %v497
    %v666 = vpack.c.b16 %v501, %v498
    %v667 = vpack.c.b16 %v505, %v502
    %v668 = vpack.c.b16 %v506, %v503
    %v669 = vpack.c.b16 %v507, %v504
    %v670 = vpack.c.b16 %v511, %v508
    %v671 = vpack.c.b16 %v512, %v509
    %v672 = vpack.c.b16 %v513, %v510
    %v673 = vpack.c.b16 %v517, %v514
    %v674 = vpack.c.b16 %v518, %v515
    %v675 = vpack.c.b16 %v519, %v516
    %v676 = vpack.c.b16 %v523, %v520
    %v677 = vpack.c.b16 %v524, %v521
    %v678 = vpack.c.b16 %v525, %v522
    %v679 = vpack.c.b16 %v529, %v526
    %v680 = vpack.c.b16 %v530, %v527
    %v681 = vpack.c.b16 %v531, %v528
    %v682 = vpack.c.b16 %v535, %v532
    %v683 = vpack.c.b16 %v536, %v533
    %v684 = vpack.c.b16 %v537, %v534
    %v685 = vpack.c.b16 %v541, %v538
    %v686 = vpack.c.b16 %v542, %v539
    %v687 = vpack.c.b16 %v543, %v540
    %v688 = vpack.c.b16 %v547, %v544
    %v689 = vpack.c.b16 %v548, %v545
    %v690 = vpack.c.b16 %v549, %v546
    %v691 = vpack.c.b16 %v553, %v550
    %v692 = vpack.c.b16 %v554, %v551
    %v693 = vpack.c.b16 %v555, %v552
    %v694 = vpack.c.b16 %v559, %v556
    %v695 = vpack.c.b16 %v560, %v557
    %v696 = vpack.c.b16 %v561, %v558
    %v697 = vpack.c.b16 %v565, %v562
    %v698 = vpack.c.b16 %v566, %v563
    %v699 = vpack.c.b16 %v567, %v564
    %v700 = vpack.c.b16 %v571, %v568
    %v701 = vpack.c.b16 %v572, %v569
    %v702 = vpack.c.b16 %v573, %v570
    %v703 = vpack.c.b16 %v577, %v574
    %v704 = vpack.c.b16 %v578, %v575
    %v705 = vpack.c.b16 %v579, %v576
    %v706 = vpack.c.b16 %v583, %v580
    %v707 = vpack.c.b16 %v584, %v581
    %v708 = vpack.c.b16 %v585, %v582
    %v709 = vpack.c.b16 %v589, %v586
    %v710 = vpack.c.b16 %v590, %v587
    %v711 = vpack.c.b16 %v591, %v588
    %v712 = vpack.c.b16 %v595, %v592
    %v713 = vpack.c.b16 %v596, %v593
    %v714 = vpack.c.b16 %v597, %v594
    %v715 = vpack.c.b16 %v601, %v598
    %v716 = vpack.c.b16 %v602, %v599
    %v717 = vpack.c.b16 %v603, %v600
    %v718 = vpack.c.b16 %v607, %v604
    %v719 = vpack.c.b16 %v608, %v605
    %v720 = vpack.c.b16 %v609, %v606
    %v721 = vpack.c.b16 %v613, %v610
    %v722 = vpack.c.b16 %v614, %v611
    %v723 = vpack.c.b16 %v615, %v612
    %v724 = vpack.c.b16 %v619, %v616
    %v725 = vpack.c.b16 %v620, %v617
    %v726 = vpack.c.b16 %v621, %v618
    %v727 = vpack.c.b16 %v625, %v622
    %v728 = vpack.c.b16 %v626, %v623
    %v729 = vpack.c.b16 %v627, %v624
    %v730 = vpack.c.b16 %v631, %v628
    %v731 = vpack.c.b16 %v632, %v629
    %v732 = vpack.c.b16 %v633, %v630
    %v733 = vpack.c.b16 %v637, %v634
    %v734 = vpack.c.b16 %v638, %v635
    %v735 = vpack.c.b16 %v639, %v636
    %832 = vmatpush.bf16.msra.mxu0 %v661
    %833 = vmatpush.bf16.msra.mxu0 %v658
    %834 = vmatpush.bf16.msra.mxu0 %v655
    %835 = vmatpush.bf16.msra.mxu0 %v652
    %836 = vmatpush.bf16.msra.mxu0 %v649
    %837 = vmatpush.bf16.msra.mxu0 %v646
    %838 = vmatpush.bf16.msra.mxu0 %v643
    %839 = vmatpush.bf16.msra.mxu0 %v640
    %840 = vmatmul.bf16.gmra.mxu0 %v180
    %v841 = vpop.f32.mrf.mxu0
    %v842 = vadd.f32 %v314, %v841
    %v843 = vpop.f32.mrf.mxu0
    %844 = vdwg.mxu0
    %845 = vmatpush.bf16.msra.mxu0 %v685
    %846 = vmatpush.bf16.msra.mxu0 %v682
    %847 = vmatpush.bf16.msra.mxu0 %v679
    %848 = vmatpush.bf16.msra.mxu0 %v676
    %849 = vmatpush.bf16.msra.mxu0 %v673
    %850 = vmatpush.bf16.msra.mxu0 %v670
    %851 = vmatpush.bf16.msra.mxu0 %v667
    %852 = vmatpush.bf16.msra.mxu0 %v664
    %853 = vmatmul.bf16.gmra.mxu0 %v181
    %v854 = vpop.f32.mrf.mxu0
    %v855 = vadd.f32 %v842, %v854
    %v856 = vpop.f32.mrf.mxu0
    %857 = vdwg.mxu0
    %858 = vmatpush.bf16.msra.mxu0 %v709
    %859 = vmatpush.bf16.msra.mxu0 %v706
    %860 = vmatpush.bf16.msra.mxu0 %v703
    %861 = vmatpush.bf16.msra.mxu0 %v700
    %862 = vmatpush.bf16.msra.mxu0 %v697
    %863 = vmatpush.bf16.msra.mxu0 %v694
    %864 = vmatpush.bf16.msra.mxu0 %v691
    %865 = vmatpush.bf16.msra.mxu0 %v688
    %866 = vmatmul.bf16.gmra.mxu0 %v182
    %v867 = vpop.f32.mrf.mxu0
    %v868 = vadd.f32 %v855, %v867
    %v869 = vpop.f32.mrf.mxu0
    %870 = vdwg.mxu0
    %871 = vmatpush.bf16.msra.mxu0 %v733
    %872 = vmatpush.bf16.msra.mxu0 %v730
    %873 = vmatpush.bf16.msra.mxu0 %v727
    %874 = vmatpush.bf16.msra.mxu0 %v724
    %875 = vmatpush.bf16.msra.mxu0 %v721
    %876 = vmatpush.bf16.msra.mxu0 %v718
    %877 = vmatpush.bf16.msra.mxu0 %v715
    %878 = vmatpush.bf16.msra.mxu0 %v712
    %879 = vmatmul.bf16.gmra.mxu0 %v183
    %v880 = vpop.f32.mrf.mxu0
    %v881 = vadd.f32 %v868, %v880
    %v882 = vpop.f32.mrf.mxu0
    %883 = vdwg.mxu0
    %884 = vmatpush.bf16.msra.mxu0 %v662
    %885 = vmatpush.bf16.msra.mxu0 %v659
    %886 = vmatpush.bf16.msra.mxu0 %v656
    %887 = vmatpush.bf16.msra.mxu0 %v653
    %888 = vmatpush.bf16.msra.mxu0 %v650
    %889 = vmatpush.bf16.msra.mxu0 %v647
    %890 = vmatpush.bf16.msra.mxu0 %v644
    %891 = vmatpush.bf16.msra.mxu0 %v641
    %892 = vmatmul.bf16.gmra.mxu0 %v180
    %v893 = vpop.f32.mrf.mxu0
    %v894 = vadd.f32 %v315, %v893
    %v895 = vpop.f32.mrf.mxu0
    %896 = vdwg.mxu0
    %897 = vmatpush.bf16.msra.mxu0 %v686
    %898 = vmatpush.bf16.msra.mxu0 %v683
    %899 = vmatpush.bf16.msra.mxu0 %v680
    %900 = vmatpush.bf16.msra.mxu0 %v677
    %901 = vmatpush.bf16.msra.mxu0 %v674
    %902 = vmatpush.bf16.msra.mxu0 %v671
    %903 = vmatpush.bf16.msra.mxu0 %v668
    %904 = vmatpush.bf16.msra.mxu0 %v665
    %905 = vmatmul.bf16.gmra.mxu0 %v181
    %v906 = vpop.f32.mrf.mxu0
    %v907 = vadd.f32 %v894, %v906
    %v908 = vpop.f32.mrf.mxu0
    %909 = vdwg.mxu0
    %910 = vmatpush.bf16.msra.mxu0 %v710
    %911 = vmatpush.bf16.msra.mxu0 %v707
    %912 = vmatpush.bf16.msra.mxu0 %v704
    %913 = vmatpush.bf16.msra.mxu0 %v701
    %914 = vmatpush.bf16.msra.mxu0 %v698
    %915 = vmatpush.bf16.msra.mxu0 %v695
    %916 = vmatpush.bf16.msra.mxu0 %v692
    %917 = vmatpush.bf16.msra.mxu0 %v689
    %918 = vmatmul.bf16.gmra.mxu0 %v182
    %v919 = vpop.f32.mrf.mxu0
    %v920 = vadd.f32 %v907, %v919
    %v921 = vpop.f32.mrf.mxu0
    %922 = vdwg.mxu0
    %923 = vmatpush.bf16.msra.mxu0 %v734
    %924 = vmatpush.bf16.msra.mxu0 %v731
    %925 = vmatpush.bf16.msra.mxu0 %v728
    %926 = vmatpush.bf16.msra.mxu0 %v725
    %927 = vmatpush.bf16.msra.mxu0 %v722
    %928 = vmatpush.bf16.msra.mxu0 %v719
    %929 = vmatpush.bf16.msra.mxu0 %v716
    %930 = vmatpush.bf16.msra.mxu0 %v713
    %931 = vmatmul.bf16.gmra.mxu0 %v183
    %v932 = vpop.f32.mrf.mxu0
    %v933 = vadd.f32 %v920, %v932
    %v934 = vpop.f32.mrf.mxu0
    %935 = vdwg.mxu0
    %936 = vmatpush.bf16.msra.mxu0 %v663
    %937 = vmatpush.bf16.msra.mxu0 %v660
    %938 = vmatpush.bf16.msra.mxu0 %v657
    %939 = vmatpush.bf16.msra.mxu0 %v654
    %940 = vmatpush.bf16.msra.mxu0 %v651
    %941 = vmatpush.bf16.msra.mxu0 %v648
    %942 = vmatpush.bf16.msra.mxu0 %v645
    %943 = vmatpush.bf16.msra.mxu0 %v642
    %944 = vmatmul.bf16.gmra.mxu0 %v180
    %v945 = vpop.f32.mrf.mxu0
    %v946 = vadd.f32 %v316, %v945
    %v947 = vpop.f32.mrf.mxu0
    %948 = vdwg.mxu0
    %949 = vmatpush.bf16.msra.mxu0 %v687
    %950 = vmatpush.bf16.msra.mxu0 %v684
    %951 = vmatpush.bf16.msra.mxu0 %v681
    %952 = vmatpush.bf16.msra.mxu0 %v678
    %953 = vmatpush.bf16.msra.mxu0 %v675
    %954 = vmatpush.bf16.msra.mxu0 %v672
    %955 = vmatpush.bf16.msra.mxu0 %v669
    %956 = vmatpush.bf16.msra.mxu0 %v666
    %957 = vmatmul.bf16.gmra.mxu0 %v181
    %v958 = vpop.f32.mrf.mxu0
    %v959 = vadd.f32 %v946, %v958
    %v960 = vpop.f32.mrf.mxu0
    %961 = vdwg.mxu0
    %962 = vmatpush.bf16.msra.mxu0 %v711
    %963 = vmatpush.bf16.msra.mxu0 %v708
    %964 = vmatpush.bf16.msra.mxu0 %v705
    %965 = vmatpush.bf16.msra.mxu0 %v702
    %966 = vmatpush.bf16.msra.mxu0 %v699
    %967 = vmatpush.bf16.msra.mxu0 %v696
    %968 = vmatpush.bf16.msra.mxu0 %v693
    %969 = vmatpush.bf16.msra.mxu0 %v690
    %970 = vmatmul.bf16.gmra.mxu0 %v182
    %v971 = vpop.f32.mrf.mxu0
    %v972 = vadd.f32 %v959, %v971
    %v973 = vpop.f32.mrf.mxu0
    %974 = vdwg.mxu0
    %975 = vmatpush.bf16.msra.mxu0 %v735
    %976 = vmatpush.bf16.msra.mxu0 %v732
    %977 = vmatpush.bf16.msra.mxu0 %v729
    %978 = vmatpush.bf16.msra.mxu0 %v726
    %979 = vmatpush.bf16.msra.mxu0 %v723
    %980 = vmatpush.bf16.msra.mxu0 %v720
    %981 = vmatpush.bf16.msra.mxu0 %v717
    %982 = vmatpush.bf16.msra.mxu0 %v714
    %983 = vmatmul.bf16.gmra.mxu0 %v183
    %v984 = vpop.f32.mrf.mxu0
    %v985 = vadd.f32 %v972, %v984
    %v986 = vpop.f32.mrf.mxu0
    %987 = vdwg.mxu0
    %v988 = vmax.f32 %v881, 0.0
    %v989 = vmax.f32 %v933, 0.0
    %v990 = vmax.f32 %v985, 0.0
    %v991 = vld [vmem:[%s5] sm:$0x7]
    %v992 = vunpack.c.l.bf16 %v991
    %v994 = vperm.slane %v992, 0
    %v995 = vperm.slane %v992, 2
    %v996 = vperm.slane %v992, 4
    %v1000 = vperm.slane %v994, 0
    %v1001 = vperm.slane %v995, 0
    %v1002 = vperm.slane %v996, 0
    %v1003 = vmul.f32 %v988, %v1000
    %v1004 = vmul.f32 %v989, %v1001
    %v1005 = vmul.f32 %v990, %v1002
    %v1006 = vadd.f32 %v1003, %v1004
    %v1007 = vadd.f32 %v1006, %v1005
    %1008 = vadd.xlane.f32.xlu0 %v1007
    %v1009 = vpop.xlane.xlu0 %1008
    %s1010 = sld [smem:[#allocation2]]
    %v1011 = vstv %s1010
    %v1012 = vadd.f32 %v1009, %v1011
    %vm1013 = vcmask 7168
    %1014 = vst.msk [vmem:[%s7] sm:$0xff] %vm1013, %v1012
    // Predicated region
    $region38: #{critic_forward.1} parent=1 // pred_check
      _
    $region39: #{critic_forward.1} parent=1 // pred_check_branch
      %1016 = sbr.rel (0) target = $region41
    $region40: #{critic_forward.1} parent=1 // pred_region
      _
    $region41: #{critic_forward.1} parent=1 // pred_fallthru
      _
    // Predicated region
    $region42: #{critic_forward.1} parent=1 // pred_check
      _
    $region43: #{critic_forward.1} parent=1 // pred_check_branch
      %1018 = sbr.rel (0) target = $region45
    $region44: #{critic_forward.1} parent=1 // pred_region
      _
    $region45: #{critic_forward.1} parent=1 // pred_fallthru
      _
    %1019 = vsyncpa [#allocation4], 1
    %1020 = vsyncpa [#allocation6], 1

</llo_original>
